<compile_context>
chip_gen: v7x
topology: tpu7x:2x2x1
jax: 0.10.0
libtpu: 0.0.40
codegen_flags: <defaults>
</compile_context>

<pallas_src>
import jax
import jax.numpy as jnp
from jax.experimental import pallas as pl
from jax.experimental.pallas import tpu as pltpu


def _round_up(x, m):
    return ((x + m - 1) // m) * m


def _tile_bytes(sub, lane, dtype):
    """VMEM bytes of a (sub, lane) tile after (sublane, 128) layout padding."""
    item = jnp.dtype(dtype).itemsize
    sub_granule = max(8, 32 // item)           # 8 for f32, 16 for bf16, 32 for int8
    return _round_up(max(sub, 1), sub_granule) * _round_up(max(lane, 1), 128) * item


def _tpu_vmem_info():
    """Best-effort (physical_vmem_bytes, has_multiple_tensorcores)."""
    kind = ""
    try:
        kind = jax.devices()[0].device_kind.lower()
    except Exception:
        pass
    is_v7 = ("v7" in kind) or ("tpu7" in kind)
    vmem = None
    try:
        vmem = int(pltpu.get_tpu_info().vmem_capacity_bytes)
    except Exception:
        vmem = None
    if vmem is None:
        vmem = (64 if is_v7 else 128) * 2**20
    return vmem, is_v7


def _linear_hyper_kernel(x_ref, pw_ref, o_ref):
    # x_ref : (tb, ts, WR)    WR = IN (or IN+1 with the bias column folded in)
    # pw_ref: (tb, WR, OUT)   per-sample weight slab (last row == bias, if any)
    # o_ref : (tb, ts, OUT)
    y = jnp.einsum(
        "bsi,bio->bso", x_ref[...], pw_ref[...],
        preferred_element_type=jnp.float32,
    )
    o_ref[...] = y.astype(o_ref.dtype)


def linear_hyper(x, params, input_dim, output_dim, bias=True,
                 stream_dtype=None, block_budget_bytes=None):
    """JAX/Pallas equivalent of LinearHyper.forward.

    x:      [B, IN] or [B, S, IN]
    params: [B, IN*OUT (+ OUT if bias)]
    stream_dtype: optional narrower dtype (e.g. jnp.bfloat16) used to stream x
      and the weight slab through the kernel; accumulation stays f32 and the
      output keeps x's dtype.  Default None keeps the module's native dtypes.
    """
    if x.ndim == 2:
        squeeze_seq = True
        x = x[:, None, :]                       # [B, 1, IN]
    elif x.ndim == 3:
        squeeze_seq = False
    else:
        raise ValueError(f"Input shape of {x.shape} not valid in LinearHyper")

    B, S, IN = x.shape
    OUT = output_dim
    if B != params.shape[0] or IN != input_dim:
        raise ValueError("x shape does not match params / input_dim")
    out_dtype = x.dtype

    # Zero-copy weight(+bias) slab view of the params row: rows [0, IN) are the
    # row-major (IN, OUT) weight, row IN (if bias) is the bias.
    wr = input_dim + 1 if bias else input_dim
    n_needed = wr * output_dim
    p = params if params.shape[1] == n_needed else params[:, :n_needed]
    pw = p.reshape(B, wr, OUT)

    # Fold the bias into the matmul (homogeneous coordinates): append a
    # constant-1 feature column so the kernel contracts against the full
    # (IN+1, OUT) slab with no in-kernel sublane slice and no broadcast add.
    if bias:
        x = jnp.concatenate([x, jnp.ones((B, S, 1), dtype=x.dtype)], axis=-1)

    compute_dtype = jnp.dtype(stream_dtype) if stream_dtype is not None else x.dtype
    if x.dtype != compute_dtype:
        x = x.astype(compute_dtype)
    if pw.dtype != compute_dtype:
        pw = pw.astype(compute_dtype)

    # ---- per-generation VMEM budget with padded-layout accounting ----------
    physical_vmem, multi_tc = _tpu_vmem_info()
    small_vmem = physical_vmem <= 64 * 2**20    # v7x-class: 64 MiB per TC
    if block_budget_bytes is None:
        block_budget_bytes = (22 if small_vmem else 40) * 2**20
    vmem_ceiling = (54 if small_vmem else 100) * 2**20

    pw_blk_per_sample = _tile_bytes(wr, OUT, compute_dtype)

    def xo_bytes(ts_):
        return (_tile_bytes(ts_, wr, compute_dtype)
                + _tile_bytes(ts_, OUT, out_dtype))

    # Sequence tile: keep all of S when it fits.  Only tile S (innermost
    # "arbitrary" grid axis; pw block index is unchanged across it so the
    # weight slab is not re-DMA'd) when x/o would crowd out the weight slab.
    ts = S
    if S > 8 and pw_blk_per_sample + xo_bytes(S) > block_budget_bytes:
        ts = 8                                   # keep (8,128) block alignment
        while ts * 2 <= S and pw_blk_per_sample + xo_bytes(ts * 2) <= block_budget_bytes:
            ts *= 2

    per_sample = pw_blk_per_sample + xo_bytes(ts)
    tb = max(1, min(B, block_budget_bytes // per_sample))

    # v7x has 2 TensorCores: aim for an even (>= 2) number of batch steps so the
    # "parallel" axis balances.  Single-TC v5e/v6e keep the largest slab.
    nb = pl.cdiv(B, tb)
    if multi_tc and B > 1:
        if nb < 2:
            tb = (B + 1) // 2
            nb = pl.cdiv(B, tb)
        if nb % 2:
            tb = max(1, pl.cdiv(B, nb + 1))
            nb = pl.cdiv(B, tb)
    ns = pl.cdiv(S, ts)
    grid = (nb, ns)

    # Double-buffered blocks + headroom for compiler-internal scratch, capped
    # below the per-generation physical VMEM.
    blk_bytes = tb * per_sample
    vmem_limit = int(min(vmem_ceiling, max(32 * 2**20, 2 * blk_bytes + 8 * 2**20)))

    x_spec = pl.BlockSpec((tb, ts, wr), lambda i, j: (i, j, 0))
    pw_spec = pl.BlockSpec((tb, wr, OUT), lambda i, j: (i, 0, 0))
    o_spec = pl.BlockSpec((tb, ts, OUT), lambda i, j: (i, j, 0))
    out_shape = jax.ShapeDtypeStruct((B, S, OUT), out_dtype)

    y = pl.pallas_call(
        _linear_hyper_kernel,
        out_shape=out_shape,
        grid_spec=pltpu.PrefetchScalarGridSpec(
            num_scalar_prefetch=0,
            grid=grid,
            in_specs=[x_spec, pw_spec],
            out_specs=o_spec,
        ),
        compiler_params=pltpu.CompilerParams(
            # Batch blocks are independent (megacore-parallel); the S axis is
            # "arbitrary" so consecutive S steps stay on one core and the
            # repeated pw block index is not re-fetched.
            dimension_semantics=("parallel", "arbitrary"),
            vmem_limit_bytes=vmem_limit,
        ),
    )(x, pw)

    # TODO(synk): deferred perf work for tiny IN/OUT (<~64): lane-dense
    # (tb, S*OUT) output relayout and a lane-packed / VPU formulation to avoid
    # per-sample tiny MXU pushes and masked <128-lane stores; both need
    # in-kernel relayouts that are riskier to lower, so the plain batched-dot
    # path is kept for robustness.
    if squeeze_seq:
        return y[:, 0, :]
    return y


if __name__ == "__main__":
    # Small deterministic test shapes: batch=4, seq=8, in=32, out=32.
    B, S, IN, OUT = 4, 8, 32, 32
    key = jax.random.PRNGKey(0)
    k_params, k_x2, k_x3, k_p3, k_xr = jax.random.split(key, 5)

    params = jax.random.normal(k_params, (B, IN * OUT + OUT), dtype=jnp.float32)
    x3 = jax.random.normal(k_x3, (B, S, IN), dtype=jnp.float32)
    x2 = jax.random.normal(k_x2, (B, IN), dtype=jnp.float32)

    # 3-D (bias), 2-D (bias), no-bias, and bf16-streaming paths.
    y3 = jax.block_until_ready(linear_hyper(x3, params, IN, OUT, bias=True))
    y2 = jax.block_until_ready(linear_hyper(x2, params, IN, OUT, bias=True))
    y3_nb = jax.block_until_ready(linear_hyper(x3, params, IN, OUT, bias=False))
    y3_bf = jax.block_until_ready(
        linear_hyper(x3, params, IN, OUT, bias=True, stream_dtype=jnp.bfloat16))

    # Ragged batch (exercises the cdiv / non-dividing-block path).
    Br = 3
    params_r = jax.random.normal(k_p3, (Br, IN * OUT + OUT), dtype=jnp.float32)
    x_r = jax.random.normal(k_xr, (Br, S, IN), dtype=jnp.float32)
    y_r = jax.block_until_ready(linear_hyper(x_r, params_r, IN, OUT, bias=True))

    # Reference in plain JAX (module semantics: y = bmm(x, W) + b, W = (IN,OUT)).
    hi = jax.lax.Precision.HIGHEST
    w_ref = params[:, : IN * OUT].reshape(B, IN, OUT)
    b_ref = params[:, IN * OUT: IN * OUT + OUT].reshape(B, 1, OUT)
    ref3 = jnp.einsum("bsi,bio->bso", x3, w_ref, precision=hi) + b_ref
    ref2 = (jnp.einsum("bsi,bio->bso", x2[:, None, :], w_ref, precision=hi) + b_ref)[:, 0, :]
    ref3_nb = jnp.einsum("bsi,bio->bso", x3, w_ref, precision=hi)

    w_ref_r = params_r[:, : IN * OUT].reshape(Br, IN, OUT)
    b_ref_r = params_r[:, IN * OUT: IN * OUT + OUT].reshape(Br, 1, OUT)
    ref_r = jnp.einsum("bsi,bio->bso", x_r, w_ref_r, precision=hi) + b_ref_r

    assert y3.shape == (B, S, OUT) and y2.shape == (B, OUT) and y_r.shape == (Br, S, OUT)
    assert jnp.allclose(y3, ref3, atol=1e-4, rtol=1e-4)
    assert jnp.allclose(y2, ref2, atol=1e-4, rtol=1e-4)
    assert jnp.allclose(y3_nb, ref3_nb, atol=1e-4, rtol=1e-4)
    assert jnp.allclose(y_r, ref_r, atol=1e-4, rtol=1e-4)
    # bf16 streaming keeps f32 accumulation; loose tolerance on bf16 inputs.
    assert y3_bf.dtype == jnp.float32
    assert jnp.allclose(y3_bf, ref3, atol=0.25, rtol=0.05)

    print("KERNEL_OK")
</pallas_src>

<mosaic_0001>
module attributes {stable_mosaic.version = 11 : i64} {
  func.func @_linear_hyper_kernel(%arg0: i32, %arg1: i32, %arg2: memref<4x8x33xf32, #tpu.memory_space<vmem>>, %arg3: memref<4x33x32xf32, #tpu.memory_space<vmem>>, %arg4: memref<4x8x32xf32, #tpu.memory_space<vmem>>) attributes {dimension_semantics = [#tpu.dimension_semantics<parallel>, #tpu.dimension_semantics<arbitrary>], iteration_bounds = array<i64: 1, 1>, scalar_prefetch = 0 : i64, scratch_operands = 0 : i64, tpu.core_type = #tpu.core_type<tc>, window_params = [{transform_indices = @transform_0, window_bounds = array<i64: 4, 8, 33>}, {transform_indices = @transform_1, window_bounds = array<i64: 4, 33, 32>}, {transform_indices = @transform_2, window_bounds = array<i64: 4, 8, 32>}]} {
    %c0 = arith.constant 0 : index
    %c0_0 = arith.constant 0 : index
    %c0_1 = arith.constant 0 : index
    %0 = vector.load %arg2[%c0, %c0_0, %c0_1] : memref<4x8x33xf32, #tpu.memory_space<vmem>>, vector<4x8x33xf32>
    %c0_2 = arith.constant 0 : index
    %c0_3 = arith.constant 0 : index
    %c0_4 = arith.constant 0 : index
    %1 = vector.load %arg3[%c0_2, %c0_3, %c0_4] : memref<4x33x32xf32, #tpu.memory_space<vmem>>, vector<4x33x32xf32>
    "tpu.trace_start"() <{level = 10 : i32, message = "bsi,bio->bso"}> : () -> ()
    %cst = arith.constant dense<0.000000e+00> : vector<4x8x32xf32>
    %2 = tpu.matmul %0, %1, %cst {dimension_numbers = #tpu.dot_dimension_numbers<[2], [1], [1], [2], [0, 0, 0, 1, 1, 2], [0], [0]>} : vector<4x8x33xf32>, vector<4x33x32xf32>, vector<4x8x32xf32> -> vector<4x8x32xf32>
    "tpu.trace_stop"() : () -> ()
    %c0_5 = arith.constant 0 : index
    %c0_6 = arith.constant 0 : index
    %c0_7 = arith.constant 0 : index
    %3 = vector.load %arg4[%c0_5, %c0_6, %c0_7] : memref<4x8x32xf32, #tpu.memory_space<vmem>>, vector<4x8x32xf32>
    tpu.vector_store %arg4[%c0_5, %c0_6, %c0_7], %2 {strides = array<i32>} : memref<4x8x32xf32, #tpu.memory_space<vmem>>, vector<4x8x32xf32>,
    return
  }
  func.func @transform_0(%arg0: i32, %arg1: i32) -> (i32, i32, i32) {
    %c0_i32 = arith.constant 0 : i32
    %c0_i32_0 = arith.constant 0 : i32
    return %arg0, %arg1, %c0_i32 : i32, i32, i32
  }
  func.func @transform_1(%arg0: i32, %arg1: i32) -> (i32, i32, i32) {
    %c0_i32 = arith.constant 0 : i32
    %c0_i32_0 = arith.constant 0 : i32
    %c0_i32_1 = arith.constant 0 : i32
    return %arg0, %c0_i32, %c0_i32_0 : i32, i32, i32
  }
  func.func @transform_2(%arg0: i32, %arg1: i32) -> (i32, i32, i32) {
    %c0_i32 = arith.constant 0 : i32
    %c0_i32_0 = arith.constant 0 : i32
    return %arg0, %arg1, %c0_i32 : i32, i32, i32
  }
}

</mosaic_0001>

<llo_original>
// kernel: tpu_custom_call.1
$region0: #{tpu_custom_call.1}
  #allocation0 [shape = 'u32[]', space=smem, size = 0x4, offset = 0x4, fixed_abs, tag = 'smem constant byte address 0x4 - core index']
  #allocation1 [shape = 'u32[144,128]{1,0:T(1,128)}', space=vmem, size = 0x12000, scoped, tag = 'internal scratch']
  %s0 = inlined_call_operand.vmem [shape: f32[4,8,33], index: 0, kind: input, shape index: {}]
  %s1 = inlined_call_operand.vmem [shape: f32[4,33,32], index: 1, kind: input, shape index: {}]
  %s2 = inlined_call_operand.hbm [shape: f32[4,8,32], index: 2, kind: output, shape index: {}]
  %s3 = sld [smem:[#allocation0]]
  $region18: #{tpu_custom_call.1} parent=0
    _
  %s5 = ssub.s32 1, %s3
  %s6 = scalar_select 0, %s5, %s3
  $region1: #{tpu_custom_call.1} parent=0
    #allocation2 [shape = 'u8[16384]{0}', space=vmem, size = 0x4000, scoped, tag = 'output window, operand 0, single buffered']
    #allocation3 [shape = 's32[1]{0}', space=sflag, size = 0x4, scoped, tag = 'scoped memory for tpu_custom_call.1']
    %7 = vsyncpa [#allocation3], 0
    // Predicated region
    $region2: #{tpu_custom_call.1} parent=1 // pred_check
      _
    $region3: #{tpu_custom_call.1} parent=1 // pred_check_branch
      %9 = sbr.rel (0) target = $region5
    $region4: #{tpu_custom_call.1} parent=1 // pred_region
      _
    $region5: #{tpu_custom_call.1} parent=1 // pred_fallthru
      _
    // Predicated region
    $region6: #{tpu_custom_call.1} parent=1 // pred_check
      _
    $region7: #{tpu_custom_call.1} parent=1 // pred_check_branch
      %11 = sbr.rel (0) target = $region9
    $region8: #{tpu_custom_call.1} parent=1 // pred_region
      _
    $region9: #{tpu_custom_call.1} parent=1 // pred_fallthru
      _
    %v12 = vld [vmem:[%s0] sm:$0xff]
    %v13 = vld [vmem:[%s0 + $0x8] sm:$0xff]
    %v14 = vld [vmem:[%s0 + $0x10] sm:$0xff]
    %v15 = vld [vmem:[%s0 + $0x18] sm:$0xff]
    %v16 = vld [vmem:[%s1] sm:$0xff]
    %v17 = vld [vmem:[%s1 + $0x8] sm:$0xff]
    %v18 = vld [vmem:[%s1 + $0x10] sm:$0xff]
    %v19 = vld [vmem:[%s1 + $0x18] sm:$0xff]
    %v20 = vld [vmem:[%s1 + $0x20] sm:$0x1]
    %v21 = vld [vmem:[%s1 + $0x28] sm:$0xff]
    %v22 = vld [vmem:[%s1 + $0x30] sm:$0xff]
    %v23 = vld [vmem:[%s1 + $0x38] sm:$0xff]
    %v24 = vld [vmem:[%s1 + $0x40] sm:$0xff]
    %v25 = vld [vmem:[%s1 + $0x48] sm:$0x1]
    %v26 = vld [vmem:[%s1 + $0x50] sm:$0xff]
    %v27 = vld [vmem:[%s1 + $0x58] sm:$0xff]
    %v28 = vld [vmem:[%s1 + $0x60] sm:$0xff]
    %v29 = vld [vmem:[%s1 + $0x68] sm:$0xff]
    %v30 = vld [vmem:[%s1 + $0x70] sm:$0x1]
    %v31 = vld [vmem:[%s1 + $0x78] sm:$0xff]
    %v32 = vld [vmem:[%s1 + $0x80] sm:$0xff]
    %v33 = vld [vmem:[%s1 + $0x88] sm:$0xff]
    %v34 = vld [vmem:[%s1 + $0x90] sm:$0xff]
    %v35 = vld [vmem:[%s1 + $0x98] sm:$0x1]
    %vm36 = vcmask 269312
    %v38 = vsel %vm36, %v12, 0
    %vm40 = vcmask 1040384
    %v42 = vsel %vm40, %v20, 0
    %44 = vmatprep.subr.mxu0 0.0
    %45 = vmatpush1.msra.mxu0 %v16
    %46 = vmatprep.subr.mxu0 0.0
    %47 = vmatpush1.msra.mxu0 %v17
    %48 = vmatprep.subr.mxu0 0.0
    %49 = vmatpush1.msra.mxu0 %v18
    %50 = vmatprep.subr.mxu0 0.0
    %51 = vmatpush1.msra.mxu0 %v19
    %52 = vmatprep.subr.mxu0 0.0
    %53 = vmatpush1.msra.mxu0 %v42
    %54 = vmatprep.subr.mxu0 0.0
    %55 = vmatpush1.msra.mxu0 0.0
    %56 = vmatprep.subr.mxu0 0.0
    %57 = vmatpush1.msra.mxu0 0.0
    %58 = vmatprep.subr.mxu0 0.0
    %59 = vmatpush1.msra.mxu0 0.0
    %60 = vmatprep.subr.mxu0 0.0
    %61 = vmatpush1.msra.mxu0 0.0
    %62 = vmatprep.subr.mxu0 0.0
    %63 = vmatpush1.msra.mxu0 0.0
    %64 = vmatprep.subr.mxu0 0.0
    %65 = vmatpush1.msra.mxu0 0.0
    %66 = vmatprep.subr.mxu0 0.0
    %67 = vmatpush1.msra.mxu0 0.0
    %68 = vmatprep.subr.mxu0 0.0
    %69 = vmatpush1.msra.mxu0 0.0
    %70 = vmatprep.subr.mxu0 0.0
    %71 = vmatpush1.msra.mxu0 0.0
    %72 = vmatprep.subr.mxu0 0.0
    %73 = vmatpush1.msra.mxu0 0.0
    %74 = vmatprep.subr.mxu0 0.0
    %75 = vmatpush1.msra.mxu0 0.0
    %76 = vmatprep.subr.mxu0 0.0
    %77 = vmatpush1.msra.mxu0 0.0
    %78 = vmatprep.subr.mxu0 0.0
    %79 = vmatpush1.msra.mxu0 0.0
    %80 = vmatprep.subr.mxu0 0.0
    %81 = vmatpush1.msra.mxu0 0.0
    %82 = vmatprep.subr.mxu0 0.0
    %83 = vmatpush1.msra.mxu0 0.0
    %84 = vmatprep.subr.mxu0 0.0
    %85 = vmatpush1.msra.mxu0 0.0
    %86 = vmatprep.subr.mxu0 0.0
    %87 = vmatpush1.msra.mxu0 0.0
    %88 = vmatprep.subr.mxu0 0.0
    %89 = vmatpush1.msra.mxu0 0.0
    %90 = vmatprep.subr.mxu0 0.0
    %91 = vmatpush1.msra.mxu0 0.0
    %92 = vmatprep.subr.mxu0 0.0
    %93 = vmatpush1.msra.mxu0 0.0
    %94 = vmatprep.subr.mxu0 0.0
    %95 = vmatpush1.msra.mxu0 0.0
    %96 = vmatprep.subr.mxu0 0.0
    %97 = vmatpush1.msra.mxu0 0.0
    %98 = vmatprep.subr.mxu0 0.0
    %99 = vmatpush1.msra.mxu0 0.0
    %100 = vmatprep.subr.mxu0 0.0
    %101 = vmatpush1.msra.mxu0 0.0
    %102 = vmatprep.subr.mxu0 0.0
    %103 = vmatpush1.msra.mxu0 0.0
    %104 = vmatprep.subr.mxu0 0.0
    %105 = vmatpush1.msra.mxu0 0.0
    %106 = vmatprep.subr.mxu0 0.0
    %107 = vmatpush1.msra.mxu0 0.0
    %108 = vmatprep.mubr.f32.mxu0 0.0
    %109 = vmatmul.mubr.f32.gmra.mrb[0].mxu0 %v38
    %v110 = vpop.f32.mrb[0].mxu0
    %v111 = vadd.f32 0.0, %v110
    %v112 = vpop.f32.mrb[0].mxu0
    %113 = vdwg.mxu0
    %v115 = vsel %vm36, %v13, 0
    %v118 = vsel %vm40, %v25, 0
    %120 = vmatprep.subr.mxu0 0.0
    %121 = vmatpush1.msra.mxu0 %v21
    %122 = vmatprep.subr.mxu0 0.0
    %123 = vmatpush1.msra.mxu0 %v22
    %124 = vmatprep.subr.mxu0 0.0
    %125 = vmatpush1.msra.mxu0 %v23
    %126 = vmatprep.subr.mxu0 0.0
    %127 = vmatpush1.msra.mxu0 %v24
    %128 = vmatprep.subr.mxu0 0.0
    %129 = vmatpush1.msra.mxu0 %v118
    %130 = vmatprep.subr.mxu0 0.0
    %131 = vmatpush1.msra.mxu0 0.0
    %132 = vmatprep.subr.mxu0 0.0
    %133 = vmatpush1.msra.mxu0 0.0
    %134 = vmatprep.subr.mxu0 0.0
    %135 = vmatpush1.msra.mxu0 0.0
    %136 = vmatprep.subr.mxu0 0.0
    %137 = vmatpush1.msra.mxu0 0.0
    %138 = vmatprep.subr.mxu0 0.0
    %139 = vmatpush1.msra.mxu0 0.0
    %140 = vmatprep.subr.mxu0 0.0
    %141 = vmatpush1.msra.mxu0 0.0
    %142 = vmatprep.subr.mxu0 0.0
    %143 = vmatpush1.msra.mxu0 0.0
    %144 = vmatprep.subr.mxu0 0.0
    %145 = vmatpush1.msra.mxu0 0.0
    %146 = vmatprep.subr.mxu0 0.0
    %147 = vmatpush1.msra.mxu0 0.0
    %148 = vmatprep.subr.mxu0 0.0
    %149 = vmatpush1.msra.mxu0 0.0
    %150 = vmatprep.subr.mxu0 0.0
    %151 = vmatpush1.msra.mxu0 0.0
    %152 = vmatprep.subr.mxu0 0.0
    %153 = vmatpush1.msra.mxu0 0.0
    %154 = vmatprep.subr.mxu0 0.0
    %155 = vmatpush1.msra.mxu0 0.0
    %156 = vmatprep.subr.mxu0 0.0
    %157 = vmatpush1.msra.mxu0 0.0
    %158 = vmatprep.subr.mxu0 0.0
    %159 = vmatpush1.msra.mxu0 0.0
    %160 = vmatprep.subr.mxu0 0.0
    %161 = vmatpush1.msra.mxu0 0.0
    %162 = vmatprep.subr.mxu0 0.0
    %163 = vmatpush1.msra.mxu0 0.0
    %164 = vmatprep.subr.mxu0 0.0
    %165 = vmatpush1.msra.mxu0 0.0
    %166 = vmatprep.subr.mxu0 0.0
    %167 = vmatpush1.msra.mxu0 0.0
    %168 = vmatprep.subr.mxu0 0.0
    %169 = vmatpush1.msra.mxu0 0.0
    %170 = vmatprep.subr.mxu0 0.0
    %171 = vmatpush1.msra.mxu0 0.0
    %172 = vmatprep.subr.mxu0 0.0
    %173 = vmatpush1.msra.mxu0 0.0
    %174 = vmatprep.subr.mxu0 0.0
    %175 = vmatpush1.msra.mxu0 0.0
    %176 = vmatprep.subr.mxu0 0.0
    %177 = vmatpush1.msra.mxu0 0.0
    %178 = vmatprep.subr.mxu0 0.0
    %179 = vmatpush1.msra.mxu0 0.0
    %180 = vmatprep.subr.mxu0 0.0
    %181 = vmatpush1.msra.mxu0 0.0
    %182 = vmatprep.subr.mxu0 0.0
    %183 = vmatpush1.msra.mxu0 0.0
    %184 = vmatprep.mubr.f32.mxu0 0.0
    %185 = vmatmul.mubr.f32.gmra.mrb[0].mxu0 %v115
    %v186 = vpop.f32.mrb[0].mxu0
    %v187 = vadd.f32 0.0, %v186
    %v188 = vpop.f32.mrb[0].mxu0
    %189 = vdwg.mxu0
    %v191 = vsel %vm36, %v14, 0
    %v194 = vsel %vm40, %v30, 0
    %196 = vmatprep.subr.mxu0 0.0
    %197 = vmatpush1.msra.mxu0 %v26
    %198 = vmatprep.subr.mxu0 0.0
    %199 = vmatpush1.msra.mxu0 %v27
    %200 = vmatprep.subr.mxu0 0.0
    %201 = vmatpush1.msra.mxu0 %v28
    %202 = vmatprep.subr.mxu0 0.0
    %203 = vmatpush1.msra.mxu0 %v29
    %204 = vmatprep.subr.mxu0 0.0
    %205 = vmatpush1.msra.mxu0 %v194
    %206 = vmatprep.subr.mxu0 0.0
    %207 = vmatpush1.msra.mxu0 0.0
    %208 = vmatprep.subr.mxu0 0.0
    %209 = vmatpush1.msra.mxu0 0.0
    %210 = vmatprep.subr.mxu0 0.0
    %211 = vmatpush1.msra.mxu0 0.0
    %212 = vmatprep.subr.mxu0 0.0
    %213 = vmatpush1.msra.mxu0 0.0
    %214 = vmatprep.subr.mxu0 0.0
    %215 = vmatpush1.msra.mxu0 0.0
    %216 = vmatprep.subr.mxu0 0.0
    %217 = vmatpush1.msra.mxu0 0.0
    %218 = vmatprep.subr.mxu0 0.0
    %219 = vmatpush1.msra.mxu0 0.0
    %220 = vmatprep.subr.mxu0 0.0
    %221 = vmatpush1.msra.mxu0 0.0
    %222 = vmatprep.subr.mxu0 0.0
    %223 = vmatpush1.msra.mxu0 0.0
    %224 = vmatprep.subr.mxu0 0.0
    %225 = vmatpush1.msra.mxu0 0.0
    %226 = vmatprep.subr.mxu0 0.0
    %227 = vmatpush1.msra.mxu0 0.0
    %228 = vmatprep.subr.mxu0 0.0
    %229 = vmatpush1.msra.mxu0 0.0
    %230 = vmatprep.subr.mxu0 0.0
    %231 = vmatpush1.msra.mxu0 0.0
    %232 = vmatprep.subr.mxu0 0.0
    %233 = vmatpush1.msra.mxu0 0.0
    %234 = vmatprep.subr.mxu0 0.0
    %235 = vmatpush1.msra.mxu0 0.0
    %236 = vmatprep.subr.mxu0 0.0
    %237 = vmatpush1.msra.mxu0 0.0
    %238 = vmatprep.subr.mxu0 0.0
    %239 = vmatpush1.msra.mxu0 0.0
    %240 = vmatprep.subr.mxu0 0.0
    %241 = vmatpush1.msra.mxu0 0.0
    %242 = vmatprep.subr.mxu0 0.0
    %243 = vmatpush1.msra.mxu0 0.0
    %244 = vmatprep.subr.mxu0 0.0
    %245 = vmatpush1.msra.mxu0 0.0
    %246 = vmatprep.subr.mxu0 0.0
    %247 = vmatpush1.msra.mxu0 0.0
    %248 = vmatprep.subr.mxu0 0.0
    %249 = vmatpush1.msra.mxu0 0.0
    %250 = vmatprep.subr.mxu0 0.0
    %251 = vmatpush1.msra.mxu0 0.0
    %252 = vmatprep.subr.mxu0 0.0
    %253 = vmatpush1.msra.mxu0 0.0
    %254 = vmatprep.subr.mxu0 0.0
    %255 = vmatpush1.msra.mxu0 0.0
    %256 = vmatprep.subr.mxu0 0.0
    %257 = vmatpush1.msra.mxu0 0.0
    %258 = vmatprep.subr.mxu0 0.0
    %259 = vmatpush1.msra.mxu0 0.0
    %260 = vmatprep.mubr.f32.mxu0 0.0
    %261 = vmatmul.mubr.f32.gmra.mrb[0].mxu0 %v191
    %v262 = vpop.f32.mrb[0].mxu0
    %v263 = vadd.f32 0.0, %v262
    %v264 = vpop.f32.mrb[0].mxu0
    %265 = vdwg.mxu0
    %v267 = vsel %vm36, %v15, 0
    %v270 = vsel %vm40, %v35, 0
    %272 = vmatprep.subr.mxu0 0.0
    %273 = vmatpush1.msra.mxu0 %v31
    %274 = vmatprep.subr.mxu0 0.0
    %275 = vmatpush1.msra.mxu0 %v32
    %276 = vmatprep.subr.mxu0 0.0
    %277 = vmatpush1.msra.mxu0 %v33
    %278 = vmatprep.subr.mxu0 0.0
    %279 = vmatpush1.msra.mxu0 %v34
    %280 = vmatprep.subr.mxu0 0.0
    %281 = vmatpush1.msra.mxu0 %v270
    %282 = vmatprep.subr.mxu0 0.0
    %283 = vmatpush1.msra.mxu0 0.0
    %284 = vmatprep.subr.mxu0 0.0
    %285 = vmatpush1.msra.mxu0 0.0
    %286 = vmatprep.subr.mxu0 0.0
    %287 = vmatpush1.msra.mxu0 0.0
    %288 = vmatprep.subr.mxu0 0.0
    %289 = vmatpush1.msra.mxu0 0.0
    %290 = vmatprep.subr.mxu0 0.0
    %291 = vmatpush1.msra.mxu0 0.0
    %292 = vmatprep.subr.mxu0 0.0
    %293 = vmatpush1.msra.mxu0 0.0
    %294 = vmatprep.subr.mxu0 0.0
    %295 = vmatpush1.msra.mxu0 0.0
    %296 = vmatprep.subr.mxu0 0.0
    %297 = vmatpush1.msra.mxu0 0.0
    %298 = vmatprep.subr.mxu0 0.0
    %299 = vmatpush1.msra.mxu0 0.0
    %300 = vmatprep.subr.mxu0 0.0
    %301 = vmatpush1.msra.mxu0 0.0
    %302 = vmatprep.subr.mxu0 0.0
    %303 = vmatpush1.msra.mxu0 0.0
    %304 = vmatprep.subr.mxu0 0.0
    %305 = vmatpush1.msra.mxu0 0.0
    %306 = vmatprep.subr.mxu0 0.0
    %307 = vmatpush1.msra.mxu0 0.0
    %308 = vmatprep.subr.mxu0 0.0
    %309 = vmatpush1.msra.mxu0 0.0
    %310 = vmatprep.subr.mxu0 0.0
    %311 = vmatpush1.msra.mxu0 0.0
    %312 = vmatprep.subr.mxu0 0.0
    %313 = vmatpush1.msra.mxu0 0.0
    %314 = vmatprep.subr.mxu0 0.0
    %315 = vmatpush1.msra.mxu0 0.0
    %316 = vmatprep.subr.mxu0 0.0
    %317 = vmatpush1.msra.mxu0 0.0
    %318 = vmatprep.subr.mxu0 0.0
    %319 = vmatpush1.msra.mxu0 0.0
    %320 = vmatprep.subr.mxu0 0.0
    %321 = vmatpush1.msra.mxu0 0.0
    %322 = vmatprep.subr.mxu0 0.0
    %323 = vmatpush1.msra.mxu0 0.0
    %324 = vmatprep.subr.mxu0 0.0
    %325 = vmatpush1.msra.mxu0 0.0
    %326 = vmatprep.subr.mxu0 0.0
    %327 = vmatpush1.msra.mxu0 0.0
    %328 = vmatprep.subr.mxu0 0.0
    %329 = vmatpush1.msra.mxu0 0.0
    %330 = vmatprep.subr.mxu0 0.0
    %331 = vmatpush1.msra.mxu0 0.0
    %332 = vmatprep.subr.mxu0 0.0
    %333 = vmatpush1.msra.mxu0 0.0
    %334 = vmatprep.subr.mxu0 0.0
    %335 = vmatpush1.msra.mxu0 0.0
    %336 = vmatprep.mubr.f32.mxu0 0.0
    %337 = vmatmul.mubr.f32.gmra.mrb[0].mxu0 %v267
    %v338 = vpop.f32.mrb[0].mxu0
    %v339 = vadd.f32 0.0, %v338
    %v340 = vpop.f32.mrb[0].mxu0
    %341 = vdwg.mxu0
    %vm342 = vcmask 261120
    %343 = vst.msk [vmem:[#allocation2] sm:$0xff] %vm342, %v111
    %344 = vst.msk [vmem:[#allocation2 + $0x8] sm:$0xff] %vm342, %v187
    %345 = vst.msk [vmem:[#allocation2 + $0x10] sm:$0xff] %vm342, %v263
    %346 = vst.msk [vmem:[#allocation2 + $0x18] sm:$0xff] %vm342, %v339
    // Predicated region
    $region10: #{tpu_custom_call.1} parent=1 // pred_check
      _
    $region11: #{tpu_custom_call.1} parent=1 // pred_check_branch
      %348 = sbr.rel (0) target = $region13
    $region12: #{tpu_custom_call.1} parent=1 // pred_region
      %s350 = ssub.s32 512, 512
      %351 = vsyncadd [#allocation3], %s350
      %s352 = sshll.u32 [#allocation2], 4
      %s353 = int_to_ptr.vmem [resolvable:$true] %s352
      %358 = dma.vmem_to_hbm [thread:$0]  %s353, 512, %s2, [#allocation3], 128, 128, 8
    $region13: #{tpu_custom_call.1} parent=1 // pred_fallthru
      _
    // Predicated region
    $region14: #{tpu_custom_call.1} parent=1 // pred_check
      _
    $region15: #{tpu_custom_call.1} parent=1 // pred_check_branch
      %360 = sbr.rel (0) target = $region17
    $region16: #{tpu_custom_call.1} parent=1 // pred_region
      %361 = dma.done [#allocation3], 512
    $region17: #{tpu_custom_call.1} parent=1 // pred_fallthru
      _
    %362 = vsyncpa [#allocation3], 1

</llo_original>
